<compile_context>
chip_gen: v5e
topology: v5e:2x2
jax: 0.10.0
libtpu: 0.0.40
codegen_flags: <defaults>
</compile_context>

<pallas_src>
import math

import jax
import jax.numpy as jnp
from jax import lax
from jax.experimental import pallas as pl
from jax.experimental.pallas import tpu as pltpu

S = 31.0
M = 0.5
EASY_MARGIN = False
COS_M = math.cos(M)
SIN_M = math.sin(M)
TH = math.cos(math.pi - M)
# NOTE: this module's spec defines mm = sin(pi - m) (no extra *m factor, unlike
# the canonical ArcFace implementation); we match the given PyTorch forward.
MM = math.sin(math.pi - M)


def arc_margin_kernel(cos_ref, lbl_ref, out_ref):
    # Load tile; math in f32 regardless of I/O dtype (v5e has no bf16 VALU).
    cosine = cos_ref[...].astype(jnp.float32)                  # (TB, TC) f32

    # Shift the label into this column tile's local coordinates: a (TB, 1) op
    # instead of adding the tile offset to every element of the iota.
    tc = cos_ref.shape[1]
    label_local = lbl_ref[...] - pl.program_id(1) * tc          # (TB, 1) i32

    # sine = sqrt(1 - cos^2); phi = cos(theta + m). The clamp avoids NaN from
    # numerical noise / padded garbage in partial tiles; it is a no-op for
    # legitimate cosine values.
    sine = jnp.sqrt(jnp.maximum(1.0 - cosine * cosine, 0.0))
    phi = cosine * COS_M - sine * SIN_M
    if EASY_MARGIN:
        phi = jnp.where(cosine > 0.0, phi, cosine)
    else:
        phi = jnp.where(cosine > TH, phi, cosine - MM)

    # One-hot select: in-tile lane iota vs. tile-local label. Labels belonging
    # to other column tiles fall outside [0, TC) and never match.
    col_ids = lax.broadcasted_iota(jnp.int32, cosine.shape, 1)
    out = S * jnp.where(col_ids == label_local, phi, cosine)
    out_ref[...] = out.astype(out_ref.dtype)


def _pick_tiles(B, C, tile_b, tile_c):
    """Tile sizes obeying the (8,128) rule, with a v7x megacore-balance nudge."""
    tb = B if B <= tile_b else max(8, (tile_b // 8) * 8)
    tc = C if C <= tile_c else max(128, (tile_c // 128) * 128)
    # v7x has 2 TensorCores: make sure at least one "parallel" axis has >= 2
    # iterations when the shapes allow a lane-/sublane-aligned split.
    if pl.cdiv(B, tb) == 1 and pl.cdiv(C, tc) == 1:
        if C >= 256:
            tc = max(128, ((C // 2) // 128) * 128)
        elif B >= 16:
            tb = max(8, ((B // 2) // 8) * 8)
    return tb, tc


def arc_margin_product(cosine, label, *, tile_b=512, tile_c=2048,
                       vmem_limit_bytes=48 << 20):
    """cosine: (B, C) f32/bf16, label: (B,) int — returns (B, C) in cosine's dtype."""
    B, C = cosine.shape
    label2d = label.astype(jnp.int32).reshape(B, 1)

    tb, tc = _pick_tiles(B, C, tile_b, tile_c)
    grid = (pl.cdiv(B, tb), pl.cdiv(C, tc))
    itemsize = jnp.dtype(cosine.dtype).itemsize

    return pl.pallas_call(
        arc_margin_kernel,
        out_shape=jax.ShapeDtypeStruct((B, C), cosine.dtype),
        grid_spec=pltpu.PrefetchScalarGridSpec(
            num_scalar_prefetch=0,
            grid=grid,
            in_specs=[
                pl.BlockSpec((tb, tc), lambda i, j: (i, j)),
                # Tiny label tile re-fetched per column tile (4*tb bytes; cheap).
                pl.BlockSpec((tb, 1), lambda i, j: (i, 0)),
            ],
            out_specs=pl.BlockSpec((tb, tc), lambda i, j: (i, j)),
        ),
        compiler_params=pltpu.CompilerParams(
            dimension_semantics=("parallel", "parallel"),
            vmem_limit_bytes=vmem_limit_bytes,
        ),
        # Same-shape, same-dtype elementwise op: let the output reuse the
        # cosine HBM buffer when the caller donates it.
        input_output_aliases={0: 0},
        cost_estimate=pl.CostEstimate(
            flops=10 * B * C,
            transcendentals=B * C,
            bytes_accessed=2 * B * C * itemsize + 4 * B,
        ),
    )(cosine, label2d)


def arc_margin_ref(cosine, label):
    # Pure-JAX reference mirroring the PyTorch forward.
    sine = jnp.sqrt(jnp.maximum(1.0 - cosine ** 2, 0.0))
    phi = cosine * COS_M - sine * SIN_M
    if EASY_MARGIN:
        phi = jnp.where(cosine > 0.0, phi, cosine)
    else:
        phi = jnp.where(cosine > TH, phi, cosine - MM)
    onehot = jax.nn.one_hot(label, cosine.shape[1], dtype=cosine.dtype)
    return S * (onehot * phi + (1.0 - onehot) * cosine)


if __name__ == "__main__":
    key = jax.random.PRNGKey(0)
    k1, k2 = jax.random.split(key)
    B, C = 16, 640  # small test shape; C = 5*128 (lane-dense)
    # cosine similarities in (-1, 1)
    cosine = jnp.tanh(jax.random.normal(k1, (B, C), dtype=jnp.float32))
    label = jax.random.randint(k2, (B,), 0, C, dtype=jnp.int32)

    # Reference computed first (kernel output may alias its input buffer).
    ref = arc_margin_ref(cosine, label)

    # 1) Default tiles: exercises the megacore-balance column split (grid (1,3)).
    out = arc_margin_product(cosine, label)
    jax.block_until_ready(out)
    assert out.shape == (B, C)
    assert jnp.allclose(out, ref, atol=1e-5, rtol=1e-5)

    # 2) Small tiles: exercises multi-tile rows + columns and a partial C tile.
    out_small = arc_margin_product(cosine, label, tile_b=8, tile_c=256)
    jax.block_until_ready(out_small)
    assert jnp.allclose(out_small, ref, atol=1e-5, rtol=1e-5)

    # 3) bf16 I/O path: math in f32, cast only at load/store.
    cosine_bf16 = cosine.astype(jnp.bfloat16)
    ref_bf16 = arc_margin_ref(cosine_bf16.astype(jnp.float32), label)
    out_bf16 = arc_margin_product(cosine_bf16, label)
    jax.block_until_ready(out_bf16)
    assert out_bf16.dtype == jnp.bfloat16
    assert jnp.allclose(out_bf16.astype(jnp.float32), ref_bf16, atol=0.3, rtol=1e-2)

    print("KERNEL_OK")
</pallas_src>

<mosaic_0001>
module attributes {stable_mosaic.version = 11 : i64} {
  func.func @arc_margin_kernel(%arg0: i32, %arg1: i32, %arg2: memref<16x256xf32, #tpu.memory_space<vmem>>, %arg3: memref<16x1xi32, #tpu.memory_space<vmem>>, %arg4: memref<16x256xf32, #tpu.memory_space<vmem>>) attributes {dimension_semantics = [#tpu.dimension_semantics<parallel>, #tpu.dimension_semantics<parallel>], iteration_bounds = array<i64: 1, 3>, scalar_prefetch = 0 : i64, scratch_operands = 0 : i64, tpu.core_type = #tpu.core_type<tc>, window_params = [{transform_indices = @transform_0, window_bounds = array<i64: 16, 256>}, {transform_indices = @transform_1, window_bounds = array<i64: 16, 1>}, {transform_indices = @transform_2, window_bounds = array<i64: 16, 256>}]} {
    %c0 = arith.constant 0 : index
    %c0_0 = arith.constant 0 : index
    %0 = vector.load %arg2[%c0, %c0_0] : memref<16x256xf32, #tpu.memory_space<vmem>>, vector<16x256xf32>
    %c0_1 = arith.constant 0 : index
    %c0_2 = arith.constant 0 : index
    %1 = vector.load %arg3[%c0_1, %c0_2] : memref<16x1xi32, #tpu.memory_space<vmem>>, vector<16x1xi32>
    %c256_i32 = arith.constant 256 : i32
    %2 = arith.muli %arg1, %c256_i32 : i32
    %3 = vector.broadcast %2 : i32 to vector<16x1xi32>
    %4 = arith.subi %1, %3 : vector<16x1xi32>
    %5 = arith.mulf %0, %0 : vector<16x256xf32>
    %cst = arith.constant 1.000000e+00 : f32
    %6 = vector.broadcast %cst : f32 to vector<16x256xf32>
    %7 = arith.subf %6, %5 : vector<16x256xf32>
    %cst_3 = arith.constant 0.000000e+00 : f32
    %8 = vector.broadcast %cst_3 : f32 to vector<16x256xf32>
    %9 = arith.maximumf %7, %8 : vector<16x256xf32>
    %10 = math.sqrt %9 : vector<16x256xf32>
    %cst_4 = arith.constant 0.87758255 : f32
    %11 = vector.broadcast %cst_4 : f32 to vector<16x256xf32>
    %12 = arith.mulf %0, %11 : vector<16x256xf32>
    %cst_5 = arith.constant 0.47942555 : f32
    %13 = vector.broadcast %cst_5 : f32 to vector<16x256xf32>
    %14 = arith.mulf %10, %13 : vector<16x256xf32>
    %15 = arith.subf %12, %14 : vector<16x256xf32>
    %cst_6 = arith.constant -0.87758255 : f32
    %16 = vector.broadcast %cst_6 : f32 to vector<16x256xf32>
    %17 = arith.cmpf ogt, %0, %16 : vector<16x256xf32>
    %cst_7 = arith.constant 0.47942555 : f32
    %18 = vector.broadcast %cst_7 : f32 to vector<16x256xf32>
    %19 = arith.subf %0, %18 : vector<16x256xf32>
    %20 = arith.select %17, %15, %19 : vector<16x256xi1>, vector<16x256xf32>
    %21 = tpu.iota {dimensions = array<i32: 1>} : vector<16x256xi32>
    %22 = vector.broadcast %4 : vector<16x1xi32> to vector<16x256xi32>
    %23 = arith.cmpi eq, %21, %22 : vector<16x256xi32>
    %24 = arith.select %23, %20, %0 : vector<16x256xi1>, vector<16x256xf32>
    %cst_8 = arith.constant 3.100000e+01 : f32
    %25 = vector.broadcast %cst_8 : f32 to vector<16x256xf32>
    %26 = arith.mulf %25, %24 : vector<16x256xf32>
    %c0_9 = arith.constant 0 : index
    %c0_10 = arith.constant 0 : index
    %27 = vector.load %arg4[%c0_9, %c0_10] : memref<16x256xf32, #tpu.memory_space<vmem>>, vector<16x256xf32>
    tpu.vector_store %arg4[%c0_9, %c0_10], %26 {strides = array<i32>} : memref<16x256xf32, #tpu.memory_space<vmem>>, vector<16x256xf32>,
    return
  }
  func.func @transform_0(%arg0: i32, %arg1: i32) -> (i32, i32) {
    %c0_i32 = arith.constant 0 : i32
    return %arg0, %arg1 : i32, i32
  }
  func.func @transform_1(%arg0: i32, %arg1: i32) -> (i32, i32) {
    %c0_i32 = arith.constant 0 : i32
    %c0_i32_0 = arith.constant 0 : i32
    return %arg0, %c0_i32 : i32, i32
  }
  func.func @transform_2(%arg0: i32, %arg1: i32) -> (i32, i32) {
    %c0_i32 = arith.constant 0 : i32
    return %arg0, %arg1 : i32, i32
  }
}

</mosaic_0001>

<llo_original>
// kernel: tpu_custom_call.1
$region0: #{tpu_custom_call.1}
  #allocation0 [shape = 'u32[]', space=smem, size = 0x4, offset = 0x4, fixed_abs, tag = 'smem constant byte address 0x4 - core index']
  #allocation1 [shape = 'u32[72,128]{1,0:T(1,128)}', space=vmem, size = 0x9000, scoped, tag = 'internal scratch']
  %s0 = inlined_call_operand.hbm [shape: f32[16,640], index: 0, kind: input, shape index: {}, may-alias: {0,2}]
  %s1 = inlined_call_operand.vmem [shape: s32[16,1], index: 1, kind: input, shape index: {}]
  %s2 = inlined_call_operand.hbm [shape: f32[16,640], index: 2, kind: output, shape index: {}, may-alias: {0,2}]
  %s3 = sld [smem:[#allocation0]]
  $region45: #{tpu_custom_call.1} parent=0
    _
  %s5 = ssub.s32 1, %s3
  %s6 = scalar_select 0, %s5, %s3
  $region1: #{tpu_custom_call.1} parent=0
    #allocation2 [shape = 'u8[32768]{0}', space=vmem, size = 0x8000, scoped, tag = 'input window, operand 0']
    #allocation3 [shape = 's32[2]{0}', space=sflag, size = 0x8, scoped, tag = 'scoped memory for tpu_custom_call.1']
    #allocation4 [shape = 's32[2]{0}', space=sflag, size = 0x8, scoped, tag = 'scoped memory for tpu_custom_call.1']
    #allocation5 [shape = 'u8[32768]{0}', space=vmem, size = 0x8000, scoped, tag = 'output window, operand 0']
    %7 = vsyncpa [#allocation3], 0
    %s8 = scalar_lea.sflag [#allocation3], 1
    %9 = vsyncpa %s8, 0
    %10 = vsyncpa [#allocation4], 0
    %s11 = scalar_lea.sflag [#allocation4], 1
    %12 = vsyncpa %s11, 0
    loop: start=0, step=1, limit=5
    $region2: #{tpu_custom_call.1} parent=1 // loop_pre_header
      _
    $region3: #{tpu_custom_call.1} parent=1 // loop_header
      %s14 = sphi 0, %s18
      %p15 = scmp.ge.s32.totalorder %s14, 5
      %s21 = sphi 0, %s33
      %s22 = sphi 0, %s29
      %s23 = sphi 0, %s21
      %s24 = sphi 0, %s22
      %s25 = sphi 0, %s23
      %s26 = sphi 0, %s24
      %s38 = sphi 0, %s40
      %s41 = sphi 0, %s38
      %s42 = sphi 0, %s41
      %s58 = sphi 0, %s42
      %s64 = sphi 0, %s66
      %s67 = sphi 0, %s64
      %s68 = sphi 0, %s67
      %s84 = sphi 0, %s68
      %s92 = sphi 0, %s94
      %s95 = sphi 0, %s92
      %s96 = sphi 0, %s95
      %s112 = sphi 0, %s96
    $region4: #{tpu_custom_call.1} parent=1 // loop_header_branch
      %17 = sbr.rel (%p15) target = $region8
    $region5: #{tpu_custom_call.1} parent=1 // loop_body
      %s19 = ssub.s32 %s14, 1
      %s20 = ssub.s32 %s14, 2
      %s27 = sadd.s32 1, %s22
      %p28 = scmp.ge.s32.totalorder %s27, 3
      %s29 = scalar_select %p28, 0, %s27
      %s30 = sadd.s32 1, %s21
      %s31 = scalar_select %p28, %s30, %s21
      %p32 = scmp.ge.s32.totalorder %s31, 1
      %s33 = scalar_select %p32, 0, %s31
      %s34 = ssub.s32 %s21, %s33
      %s35 = ssub.s32 %s22, %s29
      %s36 = sor.u32 %s34, %s35
      %p37 = scmp.eq.s32.totalorder %s36, 0
      %s39 = sadd.s32 %s38, 1
      %s40 = scalar_select %p37, %s38, %s39
      %p43 = pneg %p37
      %p44 = scmp.eq.s32.totalorder %s14, 2
      %p45 = por %p43, %p44
      %p46 = scmp.ne.s32.totalorder %s38, %s41
      %p47 = scmp.eq.s32.totalorder %s14, 0
      %p48 = por %p46, %p47
      %p49 = scmp.ne.s32.totalorder %s38, %s41
      %p50 = scmp.eq.s32.totalorder %s19, 2
      %p51 = por %p49, %p50
      %p52 = scmp.ne.s32.totalorder %s41, %s42
      %p53 = scmp.eq.s32.totalorder %s19, 0
      %p54 = por %p52, %p53
      %p55 = scmp.ne.s32.totalorder %s41, %s42
      %p56 = scmp.eq.s32.totalorder %s20, 2
      %p57 = por %p55, %p56
      %p59 = scmp.ne.s32.totalorder %s42, %s58
      %p60 = scmp.eq.s32.totalorder %s20, 0
      %p61 = por %p59, %p60
      %s62 = ssub.s32 %s21, %s33
      %p63 = scmp.eq.s32.totalorder %s62, 0
      %s65 = sadd.s32 %s64, 1
      %s66 = scalar_select %p63, %s64, %s65
      %p69 = pneg %p63
      %p70 = scmp.eq.s32.totalorder %s14, 2
      %p71 = por %p69, %p70
      %p72 = scmp.ne.s32.totalorder %s64, %s67
      %p73 = scmp.eq.s32.totalorder %s14, 0
      %p74 = por %p72, %p73
      %p75 = scmp.ne.s32.totalorder %s64, %s67
      %p76 = scmp.eq.s32.totalorder %s19, 2
      %p77 = por %p75, %p76
      %p78 = scmp.ne.s32.totalorder %s67, %s68
      %p79 = scmp.eq.s32.totalorder %s19, 0
      %p80 = por %p78, %p79
      %p81 = scmp.ne.s32.totalorder %s67, %s68
      %p82 = scmp.eq.s32.totalorder %s20, 2
      %p83 = por %p81, %p82
      %p85 = scmp.ne.s32.totalorder %s68, %s84
      %p86 = scmp.eq.s32.totalorder %s20, 0
      %p87 = por %p85, %p86
      %s88 = ssub.s32 %s21, %s33
      %s89 = ssub.s32 %s22, %s29
      %s90 = sor.u32 %s88, %s89
      %p91 = scmp.eq.s32.totalorder %s90, 0
      %s93 = sadd.s32 %s92, 1
      %s94 = scalar_select %p91, %s92, %s93
      %p97 = pneg %p91
      %p98 = scmp.eq.s32.totalorder %s14, 2
      %p99 = por %p97, %p98
      %p100 = scmp.ne.s32.totalorder %s92, %s95
      %p101 = scmp.eq.s32.totalorder %s14, 0
      %p102 = por %p100, %p101
      %p103 = scmp.ne.s32.totalorder %s92, %s95
      %p104 = scmp.eq.s32.totalorder %s19, 2
      %p105 = por %p103, %p104
      %p106 = scmp.ne.s32.totalorder %s95, %s96
      %p107 = scmp.eq.s32.totalorder %s19, 0
      %p108 = por %p106, %p107
      %p109 = scmp.ne.s32.totalorder %s95, %s96
      %p110 = scmp.eq.s32.totalorder %s20, 2
      %p111 = por %p109, %p110
      %p113 = scmp.ne.s32.totalorder %s96, %s112
      %p114 = scmp.eq.s32.totalorder %s20, 0
      %p115 = por %p113, %p114
      %p116 = scmp.le.s32.totalorder 1, %s14
      %p117 = scmp.lt.s32.totalorder %s14, 4
      %p118 = pnand %p116, %p117
      %p119 = pneg %p118
      // Predicated region
      $region9: #{tpu_custom_call.1} parent=5 // pred_check
        _
      $region10: #{tpu_custom_call.1} parent=5 // pred_check_branch
        %121 = sbr.rel (%p118) target = $region12
      $region11: #{tpu_custom_call.1} parent=5 // pred_region
        %s122 = ssub.s32 %s14, 1
        // Predicated region
        $region13: #{tpu_custom_call.1} parent=11 // pred_check
          %p123 = pneg %p80
        $region14: #{tpu_custom_call.1} parent=11 // pred_check_branch
          %125 = sbr.rel (%p123) target = $region16
        $region15: #{tpu_custom_call.1} parent=11 // pred_region
          %s126 = smul.u32 2, %s23
          %p127 = scmp.lt.s32.totalorder %s126, 1
          %s128 = scalar_select %p127, %s126, 1
          %s129 = smul.addr %s128, 8
          %s130 = scalar_lea.vmem %s1, %s129
          %s131 = smul.u32 2, %s23
        $region16: #{tpu_custom_call.1} parent=11 // pred_fallthru
          _
      $region12: #{tpu_custom_call.1} parent=5 // pred_fallthru
        _
      %p132 = scmp.lt.s32.totalorder %s14, 3
      // Predicated region
      $region17: #{tpu_custom_call.1} parent=5 // pred_check
        %p133 = pneg %p132
      $region18: #{tpu_custom_call.1} parent=5 // pred_check_branch
        %135 = sbr.rel (%p133) target = $region20
      $region19: #{tpu_custom_call.1} parent=5 // pred_region
        // Predicated region
        $region21: #{tpu_custom_call.1} parent=19 // pred_check
          %p136 = pneg %p48
        $region22: #{tpu_custom_call.1} parent=19 // pred_check_branch
          %138 = sbr.rel (%p136) target = $region24
        $region23: #{tpu_custom_call.1} parent=19 // pred_region
          %s139 = sand.u32 %s38, 1
          %s140 = scalar_lea.sflag [#allocation3], %s139
          %s141 = sand.u32 %s38, 1
          %s142 = smul.addr %s141, 32
          %s143 = scalar_lea.vmem [#allocation2], %s142
          %s144 = smul.u32 2, %s21
          %s145 = smul.u32 2, %s22
          %s146 = ssub.s32 5, %s145
          %p147 = scmp.lt.s32.totalorder %s146, 2
          %s148 = scalar_select %p147, %s146, 2
          %s149 = smul.u32 16, %s148
          %s150 = ssub.s32 32, %s149
          %s151 = sshll.u32 %s150, 4
          %152 = vsyncadd %s140, %s151
          %p153 = scmp.ne.s32.totalorder 0, %s149
          %s154 = smul.addr %s144, 5
          %s155 = sadd.s32 %s145, %s154
          %s156 = smul.addr %s155, 8
          %s157 = scalar_lea.hbm %s0, %s156
          %s158 = smul.u32 %s148, 8
          %s159 = smul.u32 %s158, 2
          %s160 = sshll.u32 %s157, 4
          %s161 = int_to_ptr.hbm [resolvable:$true] %s160
          %s162 = sshll.u32 %s143, 4
          %s163 = int_to_ptr.vmem [resolvable:$true] %s162
          %s164 = sshll.u32 %s159, 4
          %168 = dma.hbm_to_vmem [thread:$0]  (%p153), %s161, %s164, %s163, %s140, 640, 256, %s158
        $region24: #{tpu_custom_call.1} parent=19 // pred_fallthru
          _
      $region20: #{tpu_custom_call.1} parent=5 // pred_fallthru
        _
      %p169 = scmp.le.s32.totalorder 1, %s14
      %p170 = scmp.lt.s32.totalorder %s14, 4
      %p171 = pnand %p169, %p170
      %p172 = pneg %p171
      // Predicated region
      $region25: #{tpu_custom_call.1} parent=5 // pred_check
        _
      $region26: #{tpu_custom_call.1} parent=5 // pred_check_branch
        %174 = sbr.rel (%p171) target = $region28
      $region27: #{tpu_custom_call.1} parent=5 // pred_region
        %s175 = ssub.s32 %s14, 1
        %s176 = sand.u32 %s41, 1
        %s177 = scalar_lea.sflag [#allocation3], %s176
        %s178 = sand.u32 %s41, 1
        %s179 = smul.addr %s178, 32
        %s180 = scalar_lea.vmem [#allocation2], %s179
        // Predicated region
        $region29: #{tpu_custom_call.1} parent=27 // pred_check
          %p181 = pneg %p54
        $region30: #{tpu_custom_call.1} parent=27 // pred_check_branch
          %183 = sbr.rel (%p181) target = $region32
        $region31: #{tpu_custom_call.1} parent=27 // pred_region
          %185 = dma.done %s177, 512
        $region32: #{tpu_custom_call.1} parent=27 // pred_fallthru
          _
        %s186 = sand.u32 %s41, 1
        %s187 = scalar_lea.sflag [#allocation3], %s186
        %s188 = sand.u32 %s41, 1
        %s189 = smul.addr %s188, 32
        %s190 = scalar_lea.vmem [#allocation2], %s189
        %p191 = pneg %p54
        %p192 = pneg %p51
        %s193 = smul.u32 2, %s23
        %p194 = scmp.lt.s32.totalorder %s193, 1
        %s195 = scalar_select %p194, %s193, 1
        %s196 = smul.addr %s195, 8
        %s197 = scalar_lea.vmem %s1, %s196
        %p198 = pneg %p80
        %p199 = pneg %p77
        %p200 = pneg %p108
        %p201 = pneg %p105
        %s202 = sand.u32 %s95, 1
        %s203 = scalar_lea.sflag [#allocation4], %s202
        %s204 = sand.u32 %s95, 1
        %s205 = smul.addr %s204, 32
        %s206 = scalar_lea.vmem [#allocation5], %s205
        %s207 = smul.u32 2, %s23
        %s208 = smul.u32 2, %s24
        %s209 = ssub.s32 5, %s208
        %p210 = scmp.lt.s32.totalorder %s209, 2
        %s211 = scalar_select %p210, %s209, 2
        %s212 = smul.u32 16, %s211
        %s213 = smul.u32 2, %s23
        %p214 = scmp.lt.s32.totalorder %s213, 1
        %s215 = scalar_select %p214, %s213, 1
        %s216 = smul.addr %s215, 8
        %s217 = scalar_lea.vmem %s1, %s216
        %s218 = smul.u32 2, %s23
        %s219 = smul.u32 2, %s23
        %s220 = smul.u32 2, %s24
        %s221 = ssub.s32 5, %s220
        %p222 = scmp.lt.s32.totalorder %s221, 2
        %s223 = scalar_select %p222, %s221, 2
        %s224 = smul.u32 16, %s223
        %v225 = vld [vmem:[%s180] sm:$0xff]
        %v226 = vld [vmem:[%s180 + $0x8] sm:$0xff]
        %v227 = vld [vmem:[%s180 + $0x10] sm:$0xff]
        %v228 = vld [vmem:[%s180 + $0x18] sm:$0xff]
        %v229 = vld [vmem:[%s217] sm:$0xff]
        %v230 = vld [vmem:[%s217 + $0x8] sm:$0xff]
        %s231 = smul.u32 %s24, 256
        %v232 = vstv %s231
        %v233 = vsub.s32 %v229, %v232
        %v234 = vsub.s32 %v230, %v232
        %v235 = vmul.f32 %v225, %v225
        %v236 = vmul.f32 %v226, %v226
        %v237 = vmul.f32 %v227, %v227
        %v238 = vmul.f32 %v228, %v228
        %v239 = vsub.f32 1.0, %v235
        %v240 = vsub.f32 1.0, %v236
        %v241 = vsub.f32 1.0, %v237
        %v242 = vsub.f32 1.0, %v238
        %v243 = vmax.f32 %v239, 0.0
        %v244 = vmax.f32 %v240, 0.0
        %v245 = vmax.f32 %v241, 0.0
        %v246 = vmax.f32 %v242, 0.0
        %v247 = vrsqrt.pop %v243
        %v248 = vmul.f32 %v247, %v243
        %v249 = vmul.f32 %v248, %v247
        %v250 = vmul.f32 0.5, %v249
        %v251 = vsub.f32 1.5, %v250
        %v252 = vmul.f32 %v247, %v251
        %v253 = vmul.f32 %v243, %v252
        %vm254 = vcmp.eq.f32.partialorder %v243, inf
        %v255 = vsel %vm254, %v243, %v253
        %vm256 = vcmp.eq.f32.partialorder %v243, 0.0
        %v257 = vand.u32 %v243, 2147483648
        %v258 = vsel %vm256, %v257, %v255
        %v259 = vrsqrt.pop %v244
        %v260 = vmul.f32 %v259, %v244
        %v261 = vmul.f32 %v260, %v259
        %v262 = vmul.f32 0.5, %v261
        %v263 = vsub.f32 1.5, %v262
        %v264 = vmul.f32 %v259, %v263
        %v265 = vmul.f32 %v244, %v264
        %vm266 = vcmp.eq.f32.partialorder %v244, inf
        %v267 = vsel %vm266, %v244, %v265
        %vm268 = vcmp.eq.f32.partialorder %v244, 0.0
        %v269 = vand.u32 %v244, 2147483648
        %v270 = vsel %vm268, %v269, %v267
        %v271 = vrsqrt.pop %v245
        %v272 = vmul.f32 %v271, %v245
        %v273 = vmul.f32 %v272, %v271
        %v274 = vmul.f32 0.5, %v273
        %v275 = vsub.f32 1.5, %v274
        %v276 = vmul.f32 %v271, %v275
        %v277 = vmul.f32 %v245, %v276
        %vm278 = vcmp.eq.f32.partialorder %v245, inf
        %v279 = vsel %vm278, %v245, %v277
        %vm280 = vcmp.eq.f32.partialorder %v245, 0.0
        %v281 = vand.u32 %v245, 2147483648
        %v282 = vsel %vm280, %v281, %v279
        %v283 = vrsqrt.pop %v246
        %v284 = vmul.f32 %v283, %v246
        %v285 = vmul.f32 %v284, %v283
        %v286 = vmul.f32 0.5, %v285
        %v287 = vsub.f32 1.5, %v286
        %v288 = vmul.f32 %v283, %v287
        %v289 = vmul.f32 %v246, %v288
        %vm290 = vcmp.eq.f32.partialorder %v246, inf
        %v291 = vsel %vm290, %v246, %v289
        %vm292 = vcmp.eq.f32.partialorder %v246, 0.0
        %v293 = vand.u32 %v246, 2147483648
        %v294 = vsel %vm292, %v293, %v291
        %v295 = vmul.f32 %v225, 0.87758255
        %v296 = vmul.f32 %v226, 0.87758255
        %v297 = vmul.f32 %v227, 0.87758255
        %v298 = vmul.f32 %v228, 0.87758255
        %v299 = vmul.f32 %v258, 0.47942555
        %v300 = vmul.f32 %v270, 0.47942555
        %v301 = vmul.f32 %v282, 0.47942555
        %v302 = vmul.f32 %v294, 0.47942555
        %v303 = vsub.f32 %v295, %v299
        %v304 = vsub.f32 %v296, %v300
        %v305 = vsub.f32 %v297, %v301
        %v306 = vsub.f32 %v298, %v302
        %vm307 = vcmp.gt.f32.partialorder %v225, -0.87758255
        %vm308 = vcmp.gt.f32.partialorder %v226, -0.87758255
        %vm309 = vcmp.gt.f32.partialorder %v227, -0.87758255
        %vm310 = vcmp.gt.f32.partialorder %v228, -0.87758255
        %v311 = vsub.f32 %v225, 0.47942555
        %v312 = vsub.f32 %v226, 0.47942555
        %v313 = vsub.f32 %v227, 0.47942555
        %v314 = vsub.f32 %v228, 0.47942555
        %v315 = vsel %vm307, %v303, %v311
        %v316 = vsel %vm308, %v304, %v312
        %v317 = vsel %vm309, %v305, %v313
        %v318 = vsel %vm310, %v306, %v314
        %v319 = vlaneseq
        %v320 = vand.u32 %v319, 127
        %v321 = vadd.s32 %v320, 128
        %322 = vset.pattern.permute.xlu0 0
        %323 = vperm.xlu0 %322, %v233
        %v324 = vpop.permute.xlu0 %323
        %325 = vset.pattern.permute.xlu0 0
        %326 = vperm.xlu0 %325, %v234
        %v327 = vpop.permute.xlu0 %326
        %vm328 = vcmp.eq.s32.totalorder %v320, %v324
        %vm329 = vcmp.eq.s32.totalorder %v321, %v324
        %vm330 = vcmp.eq.s32.totalorder %v320, %v327
        %vm331 = vcmp.eq.s32.totalorder %v321, %v327
        %v332 = vsel %vm328, %v315, %v225
        %v333 = vsel %vm329, %v316, %v226
        %v334 = vsel %vm330, %v317, %v227
        %v335 = vsel %vm331, %v318, %v228
        %v336 = vmul.f32 %v332, 31.0
        %v337 = vmul.f32 %v333, 31.0
        %v338 = vmul.f32 %v334, 31.0
        %v339 = vmul.f32 %v335, 31.0
        %340 = vst [vmem:[%s206] sm:$0xff] %v336
        %341 = vst [vmem:[%s206 + $0x8] sm:$0xff] %v337
        %342 = vst [vmem:[%s206 + $0x10] sm:$0xff] %v338
        %343 = vst [vmem:[%s206 + $0x18] sm:$0xff] %v339
        %s344 = sand.u32 %s95, 1
        %s345 = scalar_lea.sflag [#allocation4], %s344
        %s346 = sand.u32 %s95, 1
        %s347 = smul.addr %s346, 32
        %s348 = scalar_lea.vmem [#allocation5], %s347
        // Predicated region
        $region33: #{tpu_custom_call.1} parent=27 // pred_check
          %p349 = pneg %p105
        $region34: #{tpu_custom_call.1} parent=27 // pred_check_branch
          %351 = sbr.rel (%p349) target = $region36
        $region35: #{tpu_custom_call.1} parent=27 // pred_region
          %s352 = smul.u32 2, %s23
          %s353 = smul.u32 2, %s24
          %s354 = ssub.s32 5, %s353
          %p355 = scmp.lt.s32.totalorder %s354, 2
          %s356 = scalar_select %p355, %s354, 2
          %s357 = smul.u32 16, %s356
          %s358 = ssub.s32 32, %s357
          %s359 = sshll.u32 %s358, 4
          %360 = vsyncadd %s345, %s359
          %p361 = scmp.ne.s32.totalorder 0, %s357
          %s362 = smul.addr %s352, 5
          %s363 = sadd.s32 %s353, %s362
          %s364 = smul.addr %s363, 8
          %s365 = scalar_lea.hbm %s2, %s364
          %s366 = smul.u32 %s356, 8
          %s367 = smul.u32 %s366, 2
          %s368 = sshll.u32 %s348, 4
          %s369 = int_to_ptr.vmem [resolvable:$true] %s368
          %s370 = sshll.u32 %s365, 4
          %s371 = int_to_ptr.hbm [resolvable:$true] %s370
          %s372 = sshll.u32 %s367, 4
          %376 = dma.vmem_to_hbm [thread:$0]  (%p361), %s369, %s372, %s371, %s345, 256, 640, %s366
        $region36: #{tpu_custom_call.1} parent=27 // pred_fallthru
          _
      $region28: #{tpu_custom_call.1} parent=5 // pred_fallthru
        _
      %p377 = scmp.le.s32.totalorder 2, %s14
      // Predicated region
      $region37: #{tpu_custom_call.1} parent=5 // pred_check
        %p378 = pneg %p377
      $region38: #{tpu_custom_call.1} parent=5 // pred_check_branch
        %380 = sbr.rel (%p378) target = $region40
      $region39: #{tpu_custom_call.1} parent=5 // pred_region
        %s381 = ssub.s32 %s14, 2
        // Predicated region
        $region41: #{tpu_custom_call.1} parent=39 // pred_check
          %p382 = pneg %p111
        $region42: #{tpu_custom_call.1} parent=39 // pred_check_branch
          %384 = sbr.rel (%p382) target = $region44
        $region43: #{tpu_custom_call.1} parent=39 // pred_region
          %s385 = sand.u32 %s96, 1
          %s386 = scalar_lea.sflag [#allocation4], %s385
          %s387 = sand.u32 %s96, 1
          %s388 = smul.addr %s387, 32
          %s389 = scalar_lea.vmem [#allocation5], %s388
          %391 = dma.done %s386, 512
        $region44: #{tpu_custom_call.1} parent=39 // pred_fallthru
          _
      $region40: #{tpu_custom_call.1} parent=5 // pred_fallthru
        _
    $region6: #{tpu_custom_call.1} parent=1 // loop_footer
      %s18 = sadd.s32 1, %s14
    $region7: #{tpu_custom_call.1} parent=1 // loop_footer_branch
      %13 = sbr.rel target = $region3
    $region8: #{tpu_custom_call.1} parent=1 // loop_exit
      _
    %392 = vsyncpa [#allocation3], 1
    %s393 = scalar_lea.sflag [#allocation3], 1
    %394 = vsyncpa %s393, 1
    %395 = vsyncpa [#allocation4], 1
    %s396 = scalar_lea.sflag [#allocation4], 1
    %397 = vsyncpa %s396, 1

</llo_original>
